<compile_context>
chip_gen: v5e
topology: v5e:2x2
jax: 0.10.0
libtpu: 0.0.40
codegen_flags: <defaults>
</compile_context>

<pallas_src>
import jax
import jax.numpy as jnp
from jax.experimental import pallas as pl
from jax.experimental.pallas import tpu as pltpu


# ----------------------------------------------------------------------------
# kernel
# ----------------------------------------------------------------------------
def _h_sigmoid_kernel(x_ref, o_ref):
    x = x_ref[...]
    # ReLU6(x + 3) * (1/6)  -- reciprocal-constant multiply instead of divide.
    o_ref[...] = jnp.clip(x + 3.0, 0.0, 6.0) * (1.0 / 6.0)


# ----------------------------------------------------------------------------
# wrapper
# ----------------------------------------------------------------------------
_LANES = 128          # vreg lane width: last dim of every block is lane-dense
_MAX_TILE_ROWS = 1024  # 1024 x 128 f32 = 512 KiB per buffer; safe on v5e/v6e/v7x


def h_sigmoid(x, *, tile_rows=_MAX_TILE_ROWS):
    """Elementwise h_sigmoid, shape/dtype preserving."""
    orig_shape = x.shape
    total = x.size

    # Flatten to a lane-dense (rows, 128) view.
    flat = x.reshape(-1)
    pad = (-total) % _LANES
    if pad:  # only for ragged totals; the demo shapes avoid this path
        flat = jnp.concatenate([flat, jnp.zeros((pad,), dtype=x.dtype)])
    rows = flat.size // _LANES
    x2 = flat.reshape(rows, _LANES)

    if rows <= tile_rows:
        # Single block covering the whole array (block == full dims is always
        # a legal TPU block shape, no (8,128)-divisibility requirement).
        tm = rows
        grid = (1,)
    else:
        tm = tile_rows                      # multiple of 8 -> legal sub-block
        grid = (pl.cdiv(rows, tm),)         # uneven tail handled by Pallas

    out = pl.pallas_call(
        _h_sigmoid_kernel,
        out_shape=jax.ShapeDtypeStruct((rows, _LANES), x.dtype),
        grid=grid,
        in_specs=[pl.BlockSpec((tm, _LANES), lambda i: (i, 0))],
        out_specs=pl.BlockSpec((tm, _LANES), lambda i: (i, 0)),
        compiler_params=pltpu.CompilerParams(
            dimension_semantics=("parallel",),   # megacore sharding on v7x
        ),
    )(x2)

    out = out.reshape(-1)
    if pad:
        out = out[:total]
    return out.reshape(orig_shape)


# ----------------------------------------------------------------------------
if __name__ == "__main__":
    key = jax.random.PRNGKey(0)
    # small shape consistent with a conv-activation use of h_sigmoid:
    # (batch=2, channels=4, H=16, W=16) -> 2048 elements = 16 lane-dense rows.
    x = jax.random.normal(key, (2, 4, 16, 16), jnp.float32) * 4.0

    y = h_sigmoid(x)
    y = jax.block_until_ready(y)

    # reference: ReLU6(x + 3) / 6
    ref = jnp.clip(x + 3.0, 0.0, 6.0) / 6.0
    assert y.shape == x.shape and y.dtype == x.dtype
    assert bool(jnp.all(jnp.isfinite(y)))
    assert bool(jnp.max(jnp.abs(y - ref)) < 1e-6), float(jnp.max(jnp.abs(y - ref)))

    print("KERNEL_OK")
</pallas_src>

<mosaic_0001>
module attributes {stable_mosaic.version = 11 : i64} {
  func.func @_h_sigmoid_kernel(%arg0: i32, %arg1: memref<16x128xf32, #tpu.memory_space<vmem>>, %arg2: memref<16x128xf32, #tpu.memory_space<vmem>>) attributes {dimension_semantics = [#tpu.dimension_semantics<parallel>], iteration_bounds = array<i64: 1>, scalar_prefetch = 0 : i64, scratch_operands = 0 : i64, tpu.core_type = #tpu.core_type<tc>, window_params = [{transform_indices = @transform_0, window_bounds = array<i64: 16, 128>}, {transform_indices = @transform_1, window_bounds = array<i64: 16, 128>}]} {
    %c0 = arith.constant 0 : index
    %c0_0 = arith.constant 0 : index
    %0 = vector.load %arg1[%c0, %c0_0] : memref<16x128xf32, #tpu.memory_space<vmem>>, vector<16x128xf32>
    %cst = arith.constant 3.000000e+00 : f32
    %1 = vector.broadcast %cst : f32 to vector<16x128xf32>
    %2 = arith.addf %0, %1 : vector<16x128xf32>
    %cst_1 = arith.constant 0.000000e+00 : f32
    %cst_2 = arith.constant 6.000000e+00 : f32
    %3 = vector.broadcast %cst_1 : f32 to vector<16x128xf32>
    %4 = arith.maximumf %3, %2 : vector<16x128xf32>
    %5 = vector.broadcast %cst_2 : f32 to vector<16x128xf32>
    %6 = arith.minimumf %5, %4 : vector<16x128xf32>
    %cst_3 = arith.constant 0.166666672 : f32
    %7 = vector.broadcast %cst_3 : f32 to vector<16x128xf32>
    %8 = arith.mulf %6, %7 : vector<16x128xf32>
    %c0_4 = arith.constant 0 : index
    %c0_5 = arith.constant 0 : index
    %9 = vector.load %arg2[%c0_4, %c0_5] : memref<16x128xf32, #tpu.memory_space<vmem>>, vector<16x128xf32>
    tpu.vector_store %arg2[%c0_4, %c0_5], %8 {strides = array<i32>} : memref<16x128xf32, #tpu.memory_space<vmem>>, vector<16x128xf32>,
    return
  }
  func.func @transform_0(%arg0: i32) -> (i32, i32) {
    %c0_i32 = arith.constant 0 : i32
    %c0_i32_0 = arith.constant 0 : i32
    return %arg0, %c0_i32 : i32, i32
  }
  func.func @transform_1(%arg0: i32) -> (i32, i32) {
    %c0_i32 = arith.constant 0 : i32
    %c0_i32_0 = arith.constant 0 : i32
    return %arg0, %c0_i32 : i32, i32
  }
}

</mosaic_0001>

<llo_original>
// kernel: tpu_custom_call.1
$region0: #{tpu_custom_call.1}
  #allocation0 [shape = 'u32[]', space=smem, size = 0x4, offset = 0x4, fixed_abs, tag = 'smem constant byte address 0x4 - core index']
  #allocation1 [shape = 'u32[72,128]{1,0:T(1,128)}', space=vmem, size = 0x9000, scoped, tag = 'internal scratch']
  %s0 = inlined_call_operand.hbm [shape: f32[16,128], index: 0, kind: input, shape index: {}]
  %s1 = inlined_call_operand.hbm [shape: f32[16,128], index: 1, kind: output, shape index: {}]
  %s2 = sld [smem:[#allocation0]]
  $region18: #{tpu_custom_call.1} parent=0
    _
  %s4 = ssub.s32 1, %s2
  %s5 = scalar_select 0, %s4, %s2
  $region1: #{tpu_custom_call.1} parent=0
    #allocation2 [shape = 'u8[8192]{0}', space=vmem, size = 0x2000, scoped, tag = 'input window, operand 0, single buffered']
    #allocation3 [shape = 's32[1]{0}', space=sflag, size = 0x4, scoped, tag = 'scoped memory for tpu_custom_call.1']
    #allocation4 [shape = 's32[1]{0}', space=sflag, size = 0x4, scoped, tag = 'scoped memory for tpu_custom_call.1']
    #allocation5 [shape = 'u8[8192]{0}', space=vmem, size = 0x2000, scoped, tag = 'output window, operand 0, single buffered']
    %6 = vsyncpa [#allocation3], 0
    %7 = vsyncpa [#allocation4], 0
    // Predicated region
    $region2: #{tpu_custom_call.1} parent=1 // pred_check
      _
    $region3: #{tpu_custom_call.1} parent=1 // pred_check_branch
      %9 = sbr.rel (0) target = $region5
    $region4: #{tpu_custom_call.1} parent=1 // pred_region
      %11 = vsyncadd [#allocation3], 0
      %s12 = sshll.u32 %s0, 4
      %s13 = int_to_ptr.hbm [resolvable:$true] %s12
      %s14 = sshll.u32 [#allocation2], 4
      %s15 = int_to_ptr.vmem [resolvable:$true] %s14
      %20 = dma.hbm_to_vmem [thread:$0]  %s13, 256, %s15, [#allocation3], 128, 128, 8
    $region5: #{tpu_custom_call.1} parent=1 // pred_fallthru
      _
    // Predicated region
    $region6: #{tpu_custom_call.1} parent=1 // pred_check
      _
    $region7: #{tpu_custom_call.1} parent=1 // pred_check_branch
      %22 = sbr.rel (0) target = $region9
    $region8: #{tpu_custom_call.1} parent=1 // pred_region
      %24 = dma.done [#allocation3], 256
    $region9: #{tpu_custom_call.1} parent=1 // pred_fallthru
      _
    %v25 = vld [vmem:[#allocation2] sm:$0xff]
    %v26 = vld [vmem:[#allocation2 + $0x8] sm:$0xff]
    %v27 = vadd.f32 %v25, 3.0
    %v28 = vadd.f32 %v26, 3.0
    %v29 = vmax.f32 %v27, 0.0
    %v30 = vmax.f32 %v28, 0.0
    %v31 = vmin.f32 %v29, 6.0
    %v32 = vmin.f32 %v30, 6.0
    %v33 = vmul.f32 %v31, 0.16666667
    %v34 = vmul.f32 %v32, 0.16666667
    %35 = vst [vmem:[#allocation5] sm:$0xff] %v33
    %36 = vst [vmem:[#allocation5 + $0x8] sm:$0xff] %v34
    // Predicated region
    $region10: #{tpu_custom_call.1} parent=1 // pred_check
      _
    $region11: #{tpu_custom_call.1} parent=1 // pred_check_branch
      %38 = sbr.rel (0) target = $region13
    $region12: #{tpu_custom_call.1} parent=1 // pred_region
      %40 = vsyncadd [#allocation4], 0
      %s41 = sshll.u32 [#allocation5], 4
      %s42 = int_to_ptr.vmem [resolvable:$true] %s41
      %s43 = sshll.u32 %s1, 4
      %s44 = int_to_ptr.hbm [resolvable:$true] %s43
      %49 = dma.vmem_to_hbm [thread:$0]  %s42, 256, %s44, [#allocation4], 128, 128, 8
    $region13: #{tpu_custom_call.1} parent=1 // pred_fallthru
      _
    // Predicated region
    $region14: #{tpu_custom_call.1} parent=1 // pred_check
      _
    $region15: #{tpu_custom_call.1} parent=1 // pred_check_branch
      %51 = sbr.rel (0) target = $region17
    $region16: #{tpu_custom_call.1} parent=1 // pred_region
      %53 = dma.done [#allocation4], 256
    $region17: #{tpu_custom_call.1} parent=1 // pred_fallthru
      _
    %54 = vsyncpa [#allocation3], 1
    %55 = vsyncpa [#allocation4], 1

</llo_original>
